<compile_context>
chip_gen: v5e
topology: v5e:2x2
jax: 0.10.0
libtpu: 0.0.40
codegen_flags: <defaults>
</compile_context>

<pallas_src>
import functools

import jax
import jax.numpy as jnp
from jax import lax
from jax.experimental import pallas as pl
from jax.experimental.pallas import tpu as pltpu


def _round_up(x, m):
    return ((x + m - 1) // m) * m


def _pool_kernel(x_ref, eb_ref, wl_ref, pool_l_ref, acc_ref, *, num_graphs):
    """Phase 1: accumulate per-graph sums across E tiles, emit pool @ Wl^T."""
    i = pl.program_id(0)

    @pl.when(i == 0)
    def _():
        acc_ref[...] = jnp.zeros_like(acc_ref)

    x = x_ref[...]                                          # [TILE_E, D] native dtype
    eb = eb_ref[...]                                        # [TILE_E, 1] int32
    te = x.shape[0]
    gid = lax.broadcasted_iota(jnp.int32, (te, num_graphs), 1)
    one_hot_t = (gid == eb).astype(x.dtype)                 # [TILE_E, G], 0/1 exact

    # pool[g, d] += sum_e one_hot_t[e, g] * x[e, d]  (MXU, f32 accumulate)
    acc_ref[...] += lax.dot_general(
        one_hot_t, x, (((0,), (0,)), ((), ())),
        preferred_element_type=jnp.float32)

    @pl.when(i == pl.num_programs(0) - 1)
    def _():
        # Reassociated Lambda branch: pool_l = pool @ Wl^T   -> [G, D]
        wl = wl_ref[...].astype(jnp.float32)
        pool_l_ref[...] = lax.dot_general(
            acc_ref[...], wl, (((1,), (1,)), ((), ())),
            preferred_element_type=jnp.float32)


def _out_kernel(x_ref, eb_ref, wg_ref, bg_ref, pool_l_ref, o_ref, *, num_graphs):
    """Phase 2: per E tile, out = relu(x @ Wg^T + bg - one_hot @ pool_l)."""
    x = x_ref[...]                                          # [TILE_E, D] native dtype
    eb = eb_ref[...]                                        # [TILE_E, 1] int32
    te = x.shape[0]
    gid = lax.broadcasted_iota(jnp.int32, (te, num_graphs), 1)

    # Gamma(x) = x @ Wg^T + bg   (MXU in native dtype, f32 accumulation)
    wg = wg_ref[...].astype(x.dtype)
    gamma = lax.dot_general(x, wg, (((1,), (1,)), ((), ())),
                            preferred_element_type=jnp.float32)
    gamma = gamma + bg_ref[...].astype(jnp.float32)

    # Lambda(unpool) reassociated: one_hot @ pool_l  ([E,G]x[G,D], tiny K)
    one_hot_f32 = (gid == eb).astype(jnp.float32)
    lam = jnp.dot(one_hot_f32, pool_l_ref[...],
                  preferred_element_type=jnp.float32)

    o_ref[...] = jnp.maximum(gamma - lam, 0.0).astype(o_ref.dtype)


def deepset_edge_encoder(edge_attr, edge_batch, gamma_w, gamma_b, lambda_w,
                         *, num_graphs, tile_e=512):
    E, D = edge_attr.shape
    G = num_graphs

    # Pad E so it tiles cleanly. Padded rows get edge_batch == G (out of range
    # -> all-zero one-hot -> no contribution to pool) and are sliced off at end.
    e_pad8 = _round_up(max(E, 8), 8)
    te = min(tile_e, e_pad8)
    e_pad = _round_up(e_pad8, te)
    num_tiles = e_pad // te

    x = edge_attr
    eb = edge_batch.astype(jnp.int32)
    if e_pad != E:
        x = jnp.pad(x, ((0, e_pad - E), (0, 0)))
        eb = jnp.pad(eb, (0, e_pad - E), constant_values=G)
    eb2 = eb.reshape(e_pad, 1)
    bg2 = gamma_b.reshape(1, D)

    # ---- Phase 1: pool_l = (segment-sum over graphs) @ Wl^T  -> [G, D] -------
    pool_kernel = functools.partial(_pool_kernel, num_graphs=G)
    pool_l = pl.pallas_call(
        pool_kernel,
        out_shape=jax.ShapeDtypeStruct((G, D), jnp.float32),
        grid_spec=pltpu.PrefetchScalarGridSpec(
            num_scalar_prefetch=0,
            grid=(num_tiles,),
            in_specs=[
                pl.BlockSpec((te, D), lambda i: (i, 0)),     # edge_attr tile
                pl.BlockSpec((te, 1), lambda i: (i, 0)),     # edge_batch tile
                pl.BlockSpec((D, D), lambda i: (0, 0)),      # Lambda weight
            ],
            out_specs=pl.BlockSpec((G, D), lambda i: (0, 0)),
            scratch_shapes=[pltpu.VMEM((G, D), jnp.float32)],
        ),
        compiler_params=pltpu.CompilerParams(
            dimension_semantics=("arbitrary",),
            vmem_limit_bytes=64 << 20),
    )(x, eb2, lambda_w)

    # ---- Phase 2: out = relu(x @ Wg^T + bg - one_hot @ pool_l) ---------------
    out_kernel = functools.partial(_out_kernel, num_graphs=G)
    itemsize = jnp.dtype(edge_attr.dtype).itemsize
    cost = pl.CostEstimate(
        flops=2 * e_pad * (D + G) * D,
        transcendentals=0,
        bytes_accessed=2 * e_pad * D * itemsize + 4 * e_pad
        + (D * D + D + G * D) * itemsize,
    )
    out = pl.pallas_call(
        out_kernel,
        out_shape=jax.ShapeDtypeStruct((e_pad, D), edge_attr.dtype),
        grid_spec=pltpu.PrefetchScalarGridSpec(
            num_scalar_prefetch=0,
            grid=(num_tiles,),
            in_specs=[
                pl.BlockSpec((te, D), lambda i: (i, 0)),     # edge_attr tile
                pl.BlockSpec((te, 1), lambda i: (i, 0)),     # edge_batch tile
                pl.BlockSpec((D, D), lambda i: (0, 0)),      # Gamma weight
                pl.BlockSpec((1, D), lambda i: (0, 0)),      # Gamma bias
                pl.BlockSpec((G, D), lambda i: (0, 0)),      # pool @ Wl^T
            ],
            out_specs=pl.BlockSpec((te, D), lambda i: (i, 0)),
        ),
        compiler_params=pltpu.CompilerParams(
            dimension_semantics=("parallel",),               # megacore on v7x
            vmem_limit_bytes=64 << 20),
        cost_estimate=cost,
    )(x, eb2, gamma_w, bg2, pool_l)

    if e_pad != E:
        out = out[:E]
    return out


def deepset_edge_encoder_ref(edge_attr, edge_batch, gamma_w, gamma_b, lambda_w,
                             *, num_graphs):
    pool = jax.ops.segment_sum(edge_attr, edge_batch, num_segments=num_graphs)
    unpool = pool[edge_batch]
    out = edge_attr @ gamma_w.T + gamma_b - unpool @ lambda_w.T
    return jax.nn.relu(out)


if __name__ == "__main__":
    E = 64          # number of edges
    D = 32          # emb_dim
    G = 2           # number of graphs in the batch

    key = jax.random.PRNGKey(0)
    k_attr, k_wg, k_bg, k_wl = jax.random.split(key, 4)

    edge_attr = jax.random.normal(k_attr, (E, D), dtype=jnp.float32)
    # deterministic graph assignment: first 40 edges -> graph 0, rest -> graph 1
    edge_batch = jnp.concatenate(
        [jnp.zeros((40,), jnp.int32), jnp.ones((E - 40,), jnp.int32)])

    # nn.Linear(emb_dim, emb_dim) parameters, [out_features, in_features]
    gamma_w = jax.random.normal(k_wg, (D, D), dtype=jnp.float32) * 0.1
    gamma_b = jax.random.normal(k_bg, (D,), dtype=jnp.float32) * 0.1
    lambda_w = jax.random.normal(k_wl, (D, D), dtype=jnp.float32) * 0.1

    out = deepset_edge_encoder(edge_attr, edge_batch, gamma_w, gamma_b, lambda_w,
                               num_graphs=G)
    out = jax.block_until_ready(out)

    ref = deepset_edge_encoder_ref(edge_attr, edge_batch, gamma_w, gamma_b,
                                   lambda_w, num_graphs=G)
    assert out.shape == (E, D)
    assert jnp.allclose(out, ref, atol=1e-4, rtol=1e-4), "mismatch vs JAX reference"

    print("KERNEL_OK")
</pallas_src>

<mosaic_0001>
module attributes {stable_mosaic.version = 11 : i64} {
  func.func @_pool_kernel(%arg0: i32, %arg1: memref<64x32xf32, #tpu.memory_space<vmem>>, %arg2: memref<64x1xi32, #tpu.memory_space<vmem>>, %arg3: memref<32x32xf32, #tpu.memory_space<vmem>>, %arg4: memref<2x32xf32, #tpu.memory_space<vmem>>, %arg5: memref<2x32xf32, #tpu.memory_space<vmem>>) attributes {dimension_semantics = [#tpu.dimension_semantics<arbitrary>], iteration_bounds = array<i64: 1>, scalar_prefetch = 0 : i64, scratch_operands = 1 : i64, tpu.core_type = #tpu.core_type<tc>, window_params = [{transform_indices = @transform_0, window_bounds = array<i64: 64, 32>}, {transform_indices = @transform_1, window_bounds = array<i64: 64, 1>}, {pipeline_mode = #tpu.pipeline_mode<synchronous>, transform_indices = @transform_2, window_bounds = array<i64: 32, 32>}, {pipeline_mode = #tpu.pipeline_mode<synchronous>, transform_indices = @transform_3, window_bounds = array<i64: 2, 32>}]} {
    %c0_i32 = arith.constant 0 : i32
    %0 = arith.cmpi eq, %arg0, %c0_i32 : i32
    %1 = arith.extui %0 : i1 to i32
    %c0_i32_0 = arith.constant 0 : i32
    %2 = arith.cmpi ne, %1, %c0_i32_0 : i32
    scf.if %2 {
      %cst_10 = arith.constant 0.000000e+00 : f32
      %17 = vector.broadcast %cst_10 : f32 to vector<2x32xf32>
      %c0_11 = arith.constant 0 : index
      %c0_12 = arith.constant 0 : index
      %18 = vector.load %arg5[%c0_11, %c0_12] : memref<2x32xf32, #tpu.memory_space<vmem>>, vector<2x32xf32>
      tpu.vector_store %arg5[%c0_11, %c0_12], %17 {strides = array<i32>} : memref<2x32xf32, #tpu.memory_space<vmem>>, vector<2x32xf32>,
    } else {
    }
    %c0 = arith.constant 0 : index
    %c0_1 = arith.constant 0 : index
    %3 = vector.load %arg1[%c0, %c0_1] : memref<64x32xf32, #tpu.memory_space<vmem>>, vector<64x32xf32>
    %c0_2 = arith.constant 0 : index
    %c0_3 = arith.constant 0 : index
    %4 = vector.load %arg2[%c0_2, %c0_3] : memref<64x1xi32, #tpu.memory_space<vmem>>, vector<64x1xi32>
    %5 = tpu.iota {dimensions = array<i32: 1>} : vector<64x2xi32>
    %6 = vector.broadcast %4 : vector<64x1xi32> to vector<64x2xi32>
    %7 = arith.cmpi eq, %5, %6 : vector<64x2xi32>
    %8 = arith.extui %7 : vector<64x2xi1> to vector<64x2xi32>
    %9 = arith.sitofp %8 : vector<64x2xi32> to vector<64x2xf32>
    %c0_4 = arith.constant 0 : index
    %c0_5 = arith.constant 0 : index
    %10 = vector.load %arg5[%c0_4, %c0_5] : memref<2x32xf32, #tpu.memory_space<vmem>>, vector<2x32xf32>
    %cst = arith.constant dense<0.000000e+00> : vector<2x32xf32>
    %11 = tpu.matmul %9, %3, %cst {dimension_numbers = #tpu.dot_dimension_numbers<[0], [0], [1], [1], [0, 1, 1, 1], [], []>} : vector<64x2xf32>, vector<64x32xf32>, vector<2x32xf32> -> vector<2x32xf32>
    %12 = arith.addf %10, %11 : vector<2x32xf32>
    %c0_6 = arith.constant 0 : index
    %c0_7 = arith.constant 0 : index
    %13 = vector.load %arg5[%c0_6, %c0_7] : memref<2x32xf32, #tpu.memory_space<vmem>>, vector<2x32xf32>
    tpu.vector_store %arg5[%c0_6, %c0_7], %12 {strides = array<i32>} : memref<2x32xf32, #tpu.memory_space<vmem>>, vector<2x32xf32>,
    %c0_i32_8 = arith.constant 0 : i32
    %14 = arith.cmpi eq, %arg0, %c0_i32_8 : i32
    %15 = arith.extui %14 : i1 to i32
    %c0_i32_9 = arith.constant 0 : i32
    %16 = arith.cmpi ne, %15, %c0_i32_9 : i32
    scf.if %16 {
      %c0_10 = arith.constant 0 : index
      %c0_11 = arith.constant 0 : index
      %17 = vector.load %arg3[%c0_10, %c0_11] : memref<32x32xf32, #tpu.memory_space<vmem>>, vector<32x32xf32>
      %c0_12 = arith.constant 0 : index
      %c0_13 = arith.constant 0 : index
      %18 = vector.load %arg5[%c0_12, %c0_13] : memref<2x32xf32, #tpu.memory_space<vmem>>, vector<2x32xf32>
      %cst_14 = arith.constant dense<0.000000e+00> : vector<2x32xf32>
      %19 = tpu.matmul %18, %17, %cst_14 {dimension_numbers = #tpu.dot_dimension_numbers<[1], [1], [0], [0], [0, 0, 1, 0], [], []>} : vector<2x32xf32>, vector<32x32xf32>, vector<2x32xf32> -> vector<2x32xf32>
      %c0_15 = arith.constant 0 : index
      %c0_16 = arith.constant 0 : index
      %20 = vector.load %arg4[%c0_15, %c0_16] : memref<2x32xf32, #tpu.memory_space<vmem>>, vector<2x32xf32>
      tpu.vector_store %arg4[%c0_15, %c0_16], %19 {strides = array<i32>} : memref<2x32xf32, #tpu.memory_space<vmem>>, vector<2x32xf32>,
    } else {
    }
    return
  }
  func.func @transform_0(%arg0: i32) -> (i32, i32) {
    %c0_i32 = arith.constant 0 : i32
    %c0_i32_0 = arith.constant 0 : i32
    return %arg0, %c0_i32 : i32, i32
  }
  func.func @transform_1(%arg0: i32) -> (i32, i32) {
    %c0_i32 = arith.constant 0 : i32
    %c0_i32_0 = arith.constant 0 : i32
    return %arg0, %c0_i32 : i32, i32
  }
  func.func @transform_2(%arg0: i32) -> (i32, i32) {
    %c0_i32 = arith.constant 0 : i32
    %c0_i32_0 = arith.constant 0 : i32
    %c0_i32_1 = arith.constant 0 : i32
    return %c0_i32, %c0_i32_0 : i32, i32
  }
  func.func @transform_3(%arg0: i32) -> (i32, i32) {
    %c0_i32 = arith.constant 0 : i32
    %c0_i32_0 = arith.constant 0 : i32
    %c0_i32_1 = arith.constant 0 : i32
    return %c0_i32, %c0_i32_0 : i32, i32
  }
}

</mosaic_0001>

<llo_original>
// kernel: tpu_custom_call.1
$region0: #{tpu_custom_call.1}
  #allocation0 [shape = 'u32[]', space=smem, size = 0x4, offset = 0x4, fixed_abs, tag = 'smem constant byte address 0x4 - core index']
  #allocation1 [shape = 'u32[72,128]{1,0:T(1,128)}', space=vmem, size = 0x9000, scoped, tag = 'internal scratch']
  #allocation2 [shape = 'f32[2,32]{1,0:T(2,128)}', space=vmem, size = 0x400, scoped, tag = 'scratch operand']
  %s0 = inlined_call_operand.vmem [shape: f32[64,32], index: 0, kind: input, shape index: {}]
  %s1 = inlined_call_operand.vmem [shape: s32[64,1], index: 1, kind: input, shape index: {}]
  %s2 = inlined_call_operand.vmem [shape: f32[32,32], index: 2, kind: input, shape index: {}]
  %s3 = inlined_call_operand.hbm [shape: f32[2,32], index: 3, kind: output, shape index: {}]
  %s4 = sld [smem:[#allocation0]]
  $region30: #{tpu_custom_call.1} parent=0
    _
  %s6 = ssub.s32 1, %s4
  %s7 = scalar_select 0, %s6, %s4
  $region1: #{tpu_custom_call.1} parent=0
    #allocation3 [shape = 'u8[1024]{0}', space=vmem, size = 0x400, scoped, tag = 'output window, operand 0, single buffered']
    #allocation4 [shape = 's32[1]{0}', space=sflag, size = 0x4, scoped, tag = 'scoped memory for tpu_custom_call.1']
    %8 = vsyncpa [#allocation4], 0
    // Predicated region
    $region2: #{tpu_custom_call.1} parent=1 // pred_check
      _
    $region3: #{tpu_custom_call.1} parent=1 // pred_check_branch
      %10 = sbr.rel (0) target = $region5
    $region4: #{tpu_custom_call.1} parent=1 // pred_region
      _
    $region5: #{tpu_custom_call.1} parent=1 // pred_fallthru
      _
    // Predicated region
    $region6: #{tpu_custom_call.1} parent=1 // pred_check
      _
    $region7: #{tpu_custom_call.1} parent=1 // pred_check_branch
      %12 = sbr.rel (0) target = $region9
    $region8: #{tpu_custom_call.1} parent=1 // pred_region
      _
    $region9: #{tpu_custom_call.1} parent=1 // pred_fallthru
      _
    // Predicated region
    $region10: #{tpu_custom_call.1} parent=1 // pred_check
      _
    $region11: #{tpu_custom_call.1} parent=1 // pred_check_branch
      %14 = sbr.rel (0) target = $region13
    $region12: #{tpu_custom_call.1} parent=1 // pred_region
      _
    $region13: #{tpu_custom_call.1} parent=1 // pred_fallthru
      _
    %p15 = scmp.eq.s32.totalorder 0, 0
    // Predicated region
    $region14: #{tpu_custom_call.1} parent=1 // pred_check
      %p16 = pneg %p15
    $region15: #{tpu_custom_call.1} parent=1 // pred_check_branch
      %18 = sbr.rel (%p16) target = $region17
    $region16: #{tpu_custom_call.1} parent=1 // pred_region
      %vm19 = vcmask 254976
      %20 = vst.msk [vmem:[#allocation2] sm:$0x3] %vm19, 0.0
    $region17: #{tpu_custom_call.1} parent=1 // pred_fallthru
      _
    %v21 = vld [vmem:[%s0] sm:$0xff]
    %v22 = vld [vmem:[%s0 + $0x8] sm:$0xff]
    %v23 = vld [vmem:[%s0 + $0x10] sm:$0xff]
    %v24 = vld [vmem:[%s0 + $0x18] sm:$0xff]
    %v25 = vld [vmem:[%s0 + $0x20] sm:$0xff]
    %v26 = vld [vmem:[%s0 + $0x28] sm:$0xff]
    %v27 = vld [vmem:[%s0 + $0x30] sm:$0xff]
    %v28 = vld [vmem:[%s0 + $0x38] sm:$0xff]
    %v29 = vld [vmem:[%s1] sm:$0xff]
    %v30 = vld [vmem:[%s1 + $0x8] sm:$0xff]
    %v31 = vld [vmem:[%s1 + $0x10] sm:$0xff]
    %v32 = vld [vmem:[%s1 + $0x18] sm:$0xff]
    %v33 = vld [vmem:[%s1 + $0x20] sm:$0xff]
    %v34 = vld [vmem:[%s1 + $0x28] sm:$0xff]
    %v35 = vld [vmem:[%s1 + $0x30] sm:$0xff]
    %v36 = vld [vmem:[%s1 + $0x38] sm:$0xff]
    %v37 = vlaneseq
    %v38 = vand.u32 %v37, 127
    %39 = vset.pattern.permute.xlu0 0
    %40 = vperm.xlu0 %39, %v29
    %v41 = vpop.permute.xlu0 %40
    %42 = vset.pattern.permute.xlu0 0
    %43 = vperm.xlu0 %42, %v30
    %v44 = vpop.permute.xlu0 %43
    %45 = vset.pattern.permute.xlu0 0
    %46 = vperm.xlu0 %45, %v31
    %v47 = vpop.permute.xlu0 %46
    %48 = vset.pattern.permute.xlu0 0
    %49 = vperm.xlu0 %48, %v32
    %v50 = vpop.permute.xlu0 %49
    %51 = vset.pattern.permute.xlu0 0
    %52 = vperm.xlu0 %51, %v33
    %v53 = vpop.permute.xlu0 %52
    %54 = vset.pattern.permute.xlu0 0
    %55 = vperm.xlu0 %54, %v34
    %v56 = vpop.permute.xlu0 %55
    %57 = vset.pattern.permute.xlu0 0
    %58 = vperm.xlu0 %57, %v35
    %v59 = vpop.permute.xlu0 %58
    %60 = vset.pattern.permute.xlu0 0
    %61 = vperm.xlu0 %60, %v36
    %v62 = vpop.permute.xlu0 %61
    %vm63 = vcmp.eq.s32.totalorder %v38, %v41
    %vm64 = vcmp.eq.s32.totalorder %v38, %v44
    %vm65 = vcmp.eq.s32.totalorder %v38, %v47
    %vm66 = vcmp.eq.s32.totalorder %v38, %v50
    %vm67 = vcmp.eq.s32.totalorder %v38, %v53
    %vm68 = vcmp.eq.s32.totalorder %v38, %v56
    %vm69 = vcmp.eq.s32.totalorder %v38, %v59
    %vm70 = vcmp.eq.s32.totalorder %v38, %v62
    %v71 = vsel %vm63, 1, 0
    %v72 = vsel %vm64, 1, 0
    %v73 = vsel %vm65, 1, 0
    %v74 = vsel %vm66, 1, 0
    %v75 = vsel %vm67, 1, 0
    %v76 = vsel %vm68, 1, 0
    %v77 = vsel %vm69, 1, 0
    %v78 = vsel %vm70, 1, 0
    %v79 = vcvt.s32.f32 %v71
    %v80 = vcvt.s32.f32 %v72
    %v81 = vcvt.s32.f32 %v73
    %v82 = vcvt.s32.f32 %v74
    %v83 = vcvt.s32.f32 %v75
    %v84 = vcvt.s32.f32 %v76
    %v85 = vcvt.s32.f32 %v77
    %v86 = vcvt.s32.f32 %v78
    %v87 = vld [vmem:[#allocation2] sm:$0x3]
    %88 = vxpose.xlu0.b32.start [1/16] %v79, 128
    %89 = vxpose.xlu0.b32.cont [2/16] %v80, 128
    %90 = vxpose.xlu0.b32.cont [3/16] %v81, 128
    %91 = vxpose.xlu0.b32.cont [4/16] %v82, 128
    %92 = vxpose.xlu0.b32.cont [5/16] %v83, 128
    %93 = vxpose.xlu0.b32.cont [6/16] %v84, 128
    %94 = vxpose.xlu0.b32.cont [7/16] %v85, 128
    %95 = vxpose.xlu0.b32.cont [8/16] %v86, 128
    %96 = vxpose.xlu0.b32.cont [9/16] 0.0, 128
    %97 = vxpose.xlu0.b32.cont [10/16] 0.0, 128
    %98 = vxpose.xlu0.b32.cont [11/16] 0.0, 128
    %99 = vxpose.xlu0.b32.cont [12/16] 0.0, 128
    %100 = vxpose.xlu0.b32.cont [13/16] 0.0, 128
    %101 = vxpose.xlu0.b32.cont [14/16] 0.0, 128
    %102 = vxpose.xlu0.b32.cont [15/16] 0.0, 128
    %103 = vxpose.xlu0.b32.end [16/16] 0.0, 128
    %v104 = vpop.trf.xlu0
    %v105 = vpop.trf.xlu0
    %v106 = vpop.trf.xlu0
    %v107 = vpop.trf.xlu0
    %v108 = vpop.trf.xlu0
    %v109 = vpop.trf.xlu0
    %v110 = vpop.trf.xlu0
    %v111 = vpop.trf.xlu0
    %v112 = vpop.trf.xlu0
    %v113 = vpop.trf.xlu0
    %v114 = vpop.trf.xlu0
    %v115 = vpop.trf.xlu0
    %v116 = vpop.trf.xlu0
    %v117 = vpop.trf.xlu0
    %v118 = vpop.trf.xlu0
    %v119 = vpop.trf.xlu0
    %vm120 = vcmask 523264
    %v122 = vsel %vm120, %v104, 0
    %124 = vmatpush.msra.mxu0 0.0
    %125 = vmatpush.msra.mxu0 0.0
    %126 = vmatpush.msra.mxu0 0.0
    %127 = vmatpush.msra.mxu0 0.0
    %128 = vmatpush.msra.mxu0 0.0
    %129 = vmatpush.msra.mxu0 0.0
    %130 = vmatpush.msra.mxu0 0.0
    %131 = vmatpush.msra.mxu0 0.0
    %132 = vmatpush.msra.mxu0 %v28
    %133 = vmatpush.msra.mxu0 %v27
    %134 = vmatpush.msra.mxu0 %v26
    %135 = vmatpush.msra.mxu0 %v25
    %136 = vmatpush.msra.mxu0 %v24
    %137 = vmatpush.msra.mxu0 %v23
    %138 = vmatpush.msra.mxu0 %v22
    %139 = vmatpush.msra.mxu0 %v21
    %140 = vmatmul.f32.gmra.mxu0 %v122
    %v141 = vpop.f32.mrf.mxu0
    %v142 = vadd.f32 0.0, %v141
    %143 = vdwg.mxu0
    %v144 = vadd.f32 %v87, %v142
    %vm145 = vcmask 254976
    %146 = vst.msk [vmem:[#allocation2] sm:$0x3] %vm145, %v144
    // Predicated region
    $region18: #{tpu_custom_call.1} parent=1 // pred_check
      %p147 = pneg %p15
    $region19: #{tpu_custom_call.1} parent=1 // pred_check_branch
      %149 = sbr.rel (%p147) target = $region21
    $region20: #{tpu_custom_call.1} parent=1 // pred_region
      %v150 = vld [vmem:[%s2] sm:$0xff]
      %v151 = vld [vmem:[%s2 + $0x8] sm:$0xff]
      %v152 = vld [vmem:[%s2 + $0x10] sm:$0xff]
      %v153 = vld [vmem:[%s2 + $0x18] sm:$0xff]
      %v154 = vld [vmem:[#allocation2] sm:$0x3]
      %vm155 = vcmask 261120
      %v157 = vsel %vm155, %v154, 0
      %v160 = vsel %vm155, %v150, 0
      %v163 = vsel %vm155, %v151, 0
      %v166 = vsel %vm155, %v152, 0
      %v169 = vsel %vm155, %v153, 0
      %171 = vmatpush.xpose.msra.mxu0 0.0
      %172 = vmatpush.xpose.msra.mxu0 0.0
      %173 = vmatpush.xpose.msra.mxu0 0.0
      %174 = vmatpush.xpose.msra.mxu0 0.0
      %175 = vmatpush.xpose.msra.mxu0 0.0
      %176 = vmatpush.xpose.msra.mxu0 0.0
      %177 = vmatpush.xpose.msra.mxu0 0.0
      %178 = vmatpush.xpose.msra.mxu0 0.0
      %179 = vmatpush.xpose.msra.mxu0 0.0
      %180 = vmatpush.xpose.msra.mxu0 0.0
      %181 = vmatpush.xpose.msra.mxu0 0.0
      %182 = vmatpush.xpose.msra.mxu0 0.0
      %183 = vmatpush.xpose.msra.mxu0 %v169
      %184 = vmatpush.xpose.msra.mxu0 %v166
      %185 = vmatpush.xpose.msra.mxu0 %v163
      %186 = vmatpush.xpose.msra.mxu0 %v160
      %187 = vmatmul.f32.gmra.mxu0 %v157
      %v188 = vpop.f32.mrf.mxu0
      %v189 = vadd.f32 0.0, %v188
      %190 = vdwg.mxu0
      %191 = vst.msk [vmem:[#allocation3] sm:$0x3] %vm145, %v189
    $region21: #{tpu_custom_call.1} parent=1 // pred_fallthru
      _
    // Predicated region
    $region22: #{tpu_custom_call.1} parent=1 // pred_check
      _
    $region23: #{tpu_custom_call.1} parent=1 // pred_check_branch
      %193 = sbr.rel (0) target = $region25
    $region24: #{tpu_custom_call.1} parent=1 // pred_region
      %195 = vsyncadd [#allocation4], 0
      %s197 = sshll.u32 [#allocation3], 4
      %s198 = int_to_ptr.vmem [resolvable:$true] %s197
      %s199 = sshll.u32 %s3, 4
      %s200 = int_to_ptr.hbm [resolvable:$true] %s199
      %202 = dma.vmem_to_hbm [thread:$0]  %s198, 32, %s200, [#allocation4]
    $region25: #{tpu_custom_call.1} parent=1 // pred_fallthru
      _
    // Predicated region
    $region26: #{tpu_custom_call.1} parent=1 // pred_check
      _
    $region27: #{tpu_custom_call.1} parent=1 // pred_check_branch
      %204 = sbr.rel (0) target = $region29
    $region28: #{tpu_custom_call.1} parent=1 // pred_region
      %206 = dma.done [#allocation4], 32
    $region29: #{tpu_custom_call.1} parent=1 // pred_fallthru
      _
    %207 = vsyncpa [#allocation4], 1

</llo_original>
